<compile_context>
chip_gen: v5e
topology: v5e:2x2
jax: 0.10.0
libtpu: 0.0.40
codegen_flags: <defaults>
</compile_context>

<pallas_src>
import functools

import numpy as np
import jax
import jax.numpy as jnp
from jax.experimental import pallas as pl
from jax.experimental.pallas import tpu as pltpu

# default_hyper_params of the PyTorch module.
ALPHA = 0.75
GAMMA = 2.0                     # gamma == 2 -> explicit square in the kernel
WEIGHT = 1.0
IGNORE_LABEL = -1
F32_TINY = float(np.finfo(np.float32).tiny)
LOG_TINY = float(np.log(np.finfo(np.float32).tiny))   # reference's safelog clamp

LANES = 128
SUBLANES = 8
GROUP = 32                      # rows per inner step (= native int8 (32,128) tile)


def _round_up(x, m):
    return ((x + m - 1) // m) * m


def _default_num_chunks():
    """2 parallel grid chunks on dual-TensorCore chips (v7x), else 1."""
    try:
        kind = jax.devices()[0].device_kind.lower()
    except Exception:
        return 1
    return 2 if ("v7" in kind or "7x" in kind) else 1


def _focal_kernel(pred_ref, code_ref, loss_ref, cnt_ref, *, steps, block_rows, total):
    """Lane-dense focal-loss partial sums.

    pred_ref: (block_rows, 128) f32 logits of the flat (anchor, class) stream.
    code_ref: (block_rows, 128) int8 codes (-1 ignore, 0 negative, 1 one-hot).
    loss_ref / cnt_ref: resident (8, 128) f32 accumulators (one pair per chunk
    of the parallel grid axis); the tiny cross-lane reduction happens in the
    wrapper.  `total` is the number of real elements in the stream; everything
    past it (ragged tail, partial edge blocks, clamped OOB chunks) is masked.
    """
    c = pl.program_id(0)
    i = pl.program_id(1)

    @pl.when(i == 0)
    def _init():
        loss_ref[...] = jnp.zeros_like(loss_ref)
        cnt_ref[...] = jnp.zeros_like(cnt_ref)

    # Logical (unclamped) element offset of this block in the flat stream.
    # TODO(synk): element indices are int32; requires N*C < 2**31.
    elem0 = (c * steps + i) * (block_rows * LANES)

    # Hoisted intra-group element-offset constant (one (32,128) int32 tile).
    sub = jax.lax.broadcasted_iota(jnp.int32, (GROUP, LANES), 0)
    lane = jax.lax.broadcasted_iota(jnp.int32, (GROUP, LANES), 1)
    intra = sub * LANES + lane

    n_groups = block_rows // GROUP

    def body(g, carry):
        loss_acc, cnt_acc = carry
        off = pl.multiple_of(g * GROUP, GROUP)
        x = pred_ref[pl.ds(off, GROUP), :]                       # (32,128) f32
        code = code_ref[pl.ds(off, GROUP), :].astype(jnp.int32)  # (32,128)

        # Mask for the ragged tail / partial edge blocks / clamped OOB blocks.
        in_range = intra < (total - (elem0 + g * (GROUP * LANES)))
        valid = in_range & (code != IGNORE_LABEL)
        onehot = code == 1

        # log-sigmoid identities: exp + log + one accurate divide, instead of
        # sigmoid + two safelogs.  (log(1+e) ~= log1p(e) to well below tol for
        # e in (0, 1].)  Clamp at LOG_TINY to match the reference's safelog in
        # the saturated regime.
        e = jnp.exp(-jnp.abs(x))
        log1pe = jnp.log(1.0 + e)
        log_p = jnp.maximum(jnp.minimum(x, 0.0) - log1pe, LOG_TINY)     # log sig(x)
        log_1mp = jnp.maximum(-jnp.maximum(x, 0.0) - log1pe, LOG_TINY)  # log(1-sig)
        inv = 1.0 / (1.0 + e)
        is_pos = x >= 0.0
        p = jnp.where(is_pos, 1.0, e) * inv
        one_m_p = jnp.where(is_pos, e, 1.0) * inv

        pos_part = (one_m_p * one_m_p) * log_p          # gamma == 2 -> square
        neg_part = (p * p) * log_1mp
        per_elem = jnp.where(onehot, -ALPHA * pos_part, -(1.0 - ALPHA) * neg_part)
        per_elem = jnp.where(valid, per_elem, 0.0)
        pos_elem = jnp.where(in_range & onehot, 1.0, 0.0)   # one per positive anchor

        # Fold the 32 rows into the (8,128) accumulators with pure VPU adds.
        loss_acc = loss_acc + per_elem.reshape(GROUP // SUBLANES, SUBLANES, LANES).sum(axis=0)
        cnt_acc = cnt_acc + pos_elem.reshape(GROUP // SUBLANES, SUBLANES, LANES).sum(axis=0)
        return loss_acc, cnt_acc

    zero = jnp.zeros((SUBLANES, LANES), jnp.float32)
    loss_acc, cnt_acc = jax.lax.fori_loop(
        0, n_groups, body, (zero, zero), unroll=min(8, n_groups))

    loss_ref[...] += loss_acc
    cnt_ref[...] += cnt_acc


def sigmoid_cross_entropy_retina(pred, label, *, block_rows=8192, num_chunks=None):
    """pred: (B, HW, C) f32 logits; label: (B, HW, 1) or (B, HW) int. Scalar loss."""
    B, HW, C = pred.shape
    N = B * HW
    total = N * C

    if num_chunks is None:
        num_chunks = _default_num_chunks()

    rows = pl.cdiv(total, LANES)
    rows_grid = _round_up(rows, GROUP)
    if rows_grid < num_chunks * GROUP * 4:
        num_chunks = 1          # tiny input: a parallel chunk axis only adds overhead

    br = min(block_rows, pl.cdiv(rows_grid, num_chunks))
    br = max(GROUP, _round_up(br, GROUP))
    steps = pl.cdiv(rows_grid, num_chunks * br)
    max_block = pl.cdiv(rows_grid, br) - 1

    # pred: pure bitcast view of the contiguous (B, HW, C) stream when possible.
    pred_flat = pred.reshape(-1).astype(jnp.float32)
    if total == rows * LANES:
        pred_2d = pred_flat.reshape(rows, LANES)            # no copy
    else:
        # Ragged tail (< 128 elems): the only path that copies pred.
        pred_2d = jnp.pad(pred_flat, (0, rows_grid * LANES - total)
                          ).reshape(rows_grid, LANES)

    # Per-element int8 code stream matching pred: 1 one-hot, 0 negative, -1 ignore.
    lbl = label.reshape(N, 1).astype(jnp.int32)
    cls_row = jnp.arange(1, C + 1, dtype=jnp.int32)[None, :]
    code = jnp.where(lbl == cls_row, 1,
                     jnp.where(lbl == IGNORE_LABEL, -1, 0)).astype(jnp.int8)
    code_2d = jnp.pad(code.reshape(-1), (0, rows_grid * LANES - total),
                      constant_values=-1).reshape(rows_grid, LANES)

    kernel = functools.partial(_focal_kernel, steps=steps, block_rows=br, total=total)

    def in_map(c, i):
        # Clamp so DMAs always start inside the arrays; clamped (repeated)
        # blocks are fully masked in-kernel via the global element index.
        return (jnp.minimum(c * steps + i, max_block), 0)

    out_map = lambda c, i: (c, 0)

    loss_parts, cnt_parts = pl.pallas_call(
        kernel,
        out_shape=(jax.ShapeDtypeStruct((num_chunks * SUBLANES, LANES), jnp.float32),
                   jax.ShapeDtypeStruct((num_chunks * SUBLANES, LANES), jnp.float32)),
        grid=(num_chunks, steps),
        in_specs=[pl.BlockSpec((br, LANES), in_map),
                  pl.BlockSpec((br, LANES), in_map)],
        out_specs=(pl.BlockSpec((SUBLANES, LANES), out_map),
                   pl.BlockSpec((SUBLANES, LANES), out_map)),
        compiler_params=pltpu.CompilerParams(
            dimension_semantics=("parallel", "arbitrary"),
            vmem_limit_bytes=32 * 1024 * 1024),
    )(pred_2d, code_2d)

    # Tiny final glue: loss.sum() / max(num_positives, 1) * weight
    loss_sum = jnp.sum(loss_parts)
    pos_cnt = jnp.sum(cnt_parts)
    return loss_sum / jnp.maximum(pos_cnt, 1.0) * WEIGHT


def _reference(pred, label):
    """Pure-JAX reference mirroring the PyTorch forward."""
    mask = (label != IGNORE_LABEL).astype(jnp.float32)              # (B, HW, 1)
    vlabel = (label.astype(jnp.float32) * mask).astype(jnp.int32)
    C = pred.shape[2]
    cls = jnp.arange(1, C + 1, dtype=jnp.int32)
    onehot = (vlabel == cls[None, None, :]).astype(jnp.float32)      # (B, HW, C)
    p = jax.nn.sigmoid(pred.astype(jnp.float32))
    safelog = lambda t: jnp.log(jnp.maximum(F32_TINY, t))
    pos_part = (1.0 - p) ** GAMMA * onehot * safelog(p)
    neg_part = p ** GAMMA * (1.0 - onehot) * safelog(1.0 - p)
    loss = -(ALPHA * pos_part + (1.0 - ALPHA) * neg_part).sum(axis=2) * mask[..., 0]
    positive = (label > 0).astype(jnp.float32)
    return loss.sum() / jnp.maximum(positive.sum(), 1.0) * WEIGHT


if __name__ == "__main__":
    key = jax.random.PRNGKey(0)
    k1, k2, k3, k4 = jax.random.split(key, 4)

    # Case 1: aligned shapes (pred view is a pure bitcast; partial edge block).
    B, HW, C = 2, 256, 4
    pred = jax.random.normal(k1, (B, HW, C), dtype=jnp.float32)
    label = jax.random.randint(k2, (B, HW, 1), -1, C + 1, dtype=jnp.int32)
    loss = jax.block_until_ready(sigmoid_cross_entropy_retina(pred, label))
    ref = jax.block_until_ready(_reference(pred, label))
    np.testing.assert_allclose(np.asarray(loss), np.asarray(ref),
                               rtol=1e-4, atol=1e-5)

    # Case 2: ragged shape (flat tail not a multiple of 128; C does not divide 128).
    B2, HW2, C2 = 1, 100, 3
    pred_b = jax.random.normal(k3, (B2, HW2, C2), dtype=jnp.float32)
    label_b = jax.random.randint(k4, (B2, HW2, 1), -1, C2 + 1, dtype=jnp.int32)
    loss_b = jax.block_until_ready(sigmoid_cross_entropy_retina(pred_b, label_b))
    ref_b = jax.block_until_ready(_reference(pred_b, label_b))
    np.testing.assert_allclose(np.asarray(loss_b), np.asarray(ref_b),
                               rtol=1e-4, atol=1e-5)

    # Case 3: multi-step grid + 2 parallel chunks (exercises the resident
    # accumulators across the reduction axis and the clamped index_map).
    B3, HW3, C3 = 2, 4096, 4
    pred_c = jax.random.normal(k1, (B3, HW3, C3), dtype=jnp.float32)
    label_c = jax.random.randint(k2, (B3, HW3, 1), -1, C3 + 1, dtype=jnp.int32)
    loss_c = jax.block_until_ready(
        sigmoid_cross_entropy_retina(pred_c, label_c, block_rows=64, num_chunks=2))
    ref_c = jax.block_until_ready(_reference(pred_c, label_c))
    np.testing.assert_allclose(np.asarray(loss_c), np.asarray(ref_c),
                               rtol=1e-4, atol=1e-5)

    print("KERNEL_OK")
</pallas_src>

<mosaic_0001>
module attributes {stable_mosaic.version = 11 : i64} {
  func.func @_focal_kernel(%arg0: i32, %arg1: i32, %arg2: memref<32x128xf32, #tpu.memory_space<vmem>>, %arg3: memref<32x128xi8, #tpu.memory_space<vmem>>, %arg4: memref<8x128xf32, #tpu.memory_space<vmem>>, %arg5: memref<8x128xf32, #tpu.memory_space<vmem>>) attributes {dimension_semantics = [#tpu.dimension_semantics<parallel>, #tpu.dimension_semantics<arbitrary>], iteration_bounds = array<i64: 1, 1>, scalar_prefetch = 0 : i64, scratch_operands = 0 : i64, tpu.core_type = #tpu.core_type<tc>, window_params = [{transform_indices = @transform_0, window_bounds = array<i64: 32, 128>}, {transform_indices = @transform_1, window_bounds = array<i64: 32, 128>}, {transform_indices = @transform_2, window_bounds = array<i64: 8, 128>}, {transform_indices = @transform_3, window_bounds = array<i64: 8, 128>}]} {
    %c0_i32 = arith.constant 0 : i32
    %0 = arith.cmpi eq, %arg1, %c0_i32 : i32
    %1 = arith.extui %0 : i1 to i32
    %c0_i32_0 = arith.constant 0 : i32
    %2 = arith.cmpi ne, %1, %c0_i32_0 : i32
    scf.if %2 {
      %cst_33 = arith.constant 0.000000e+00 : f32
      %87 = vector.broadcast %cst_33 : f32 to vector<8x128xf32>
      %c0_34 = arith.constant 0 : index
      %c0_35 = arith.constant 0 : index
      %88 = vector.load %arg4[%c0_34, %c0_35] : memref<8x128xf32, #tpu.memory_space<vmem>>, vector<8x128xf32>
      tpu.vector_store %arg4[%c0_34, %c0_35], %87 {strides = array<i32>} : memref<8x128xf32, #tpu.memory_space<vmem>>, vector<8x128xf32>,
      %cst_36 = arith.constant 0.000000e+00 : f32
      %89 = vector.broadcast %cst_36 : f32 to vector<8x128xf32>
      %c0_37 = arith.constant 0 : index
      %c0_38 = arith.constant 0 : index
      %90 = vector.load %arg5[%c0_37, %c0_38] : memref<8x128xf32, #tpu.memory_space<vmem>>, vector<8x128xf32>
      tpu.vector_store %arg5[%c0_37, %c0_38], %89 {strides = array<i32>} : memref<8x128xf32, #tpu.memory_space<vmem>>, vector<8x128xf32>,
    } else {
    }
    %c1_i32 = arith.constant 1 : i32
    %3 = arith.muli %arg0, %c1_i32 : i32
    %4 = arith.addi %3, %arg1 : i32
    %c4096_i32 = arith.constant 4096 : i32
    %5 = arith.muli %4, %c4096_i32 : i32
    %6 = tpu.iota {dimensions = array<i32: 0>} : vector<32x128xi32>
    %7 = tpu.iota {dimensions = array<i32: 1>} : vector<32x128xi32>
    %c128_i32 = arith.constant 128 : i32
    %8 = vector.broadcast %c128_i32 : i32 to vector<32x128xi32>
    %9 = arith.muli %6, %8 : vector<32x128xi32>
    %10 = arith.addi %9, %7 : vector<32x128xi32>
    %cst = arith.constant 0.000000e+00 : f32
    %11 = vector.broadcast %cst : f32 to vector<8x128xf32>
    %c0_i32_1 = arith.constant 0 : i32
    %c32_i32 = arith.constant 32 : i32
    %12 = arith.muli %c0_i32_1, %c32_i32 : i32
    %13 = tpu.assume_multiple %12, 32 : i32
    %14 = arith.index_cast %13 : i32 to index
    %c0 = arith.constant 0 : index
    %15 = vector.load %arg2[%14, %c0] : memref<32x128xf32, #tpu.memory_space<vmem>>, vector<32x128xf32>
    %16 = arith.index_cast %13 : i32 to index
    %c0_2 = arith.constant 0 : index
    %17 = vector.load %arg3[%16, %c0_2] : memref<32x128xi8, #tpu.memory_space<vmem>>, vector<32x128xi8>
    %18 = arith.extsi %17 : vector<32x128xi8> to vector<32x128xi32>
    %c4096_i32_3 = arith.constant 4096 : i32
    %19 = arith.muli %c0_i32_1, %c4096_i32_3 : i32
    %20 = arith.addi %5, %19 : i32
    %c2048_i32 = arith.constant 2048 : i32
    %21 = arith.subi %c2048_i32, %20 : i32
    %22 = vector.broadcast %21 : i32 to vector<32x128xi32>
    %23 = arith.cmpi slt, %10, %22 : vector<32x128xi32>
    %c-1_i32 = arith.constant -1 : i32
    %24 = vector.broadcast %c-1_i32 : i32 to vector<32x128xi32>
    %25 = arith.cmpi ne, %18, %24 : vector<32x128xi32>
    %26 = arith.andi %23, %25 : vector<32x128xi1>
    %c1_i32_4 = arith.constant 1 : i32
    %27 = vector.broadcast %c1_i32_4 : i32 to vector<32x128xi32>
    %28 = arith.cmpi eq, %18, %27 : vector<32x128xi32>
    %29 = math.absf %15 : vector<32x128xf32>
    %cst_5 = arith.constant 0.000000e+00 : f32
    %30 = vector.broadcast %cst_5 : f32 to vector<32x128xf32>
    %31 = arith.subf %30, %29 : vector<32x128xf32>
    %32 = math.exp %31 : vector<32x128xf32>
    %cst_6 = arith.constant 1.000000e+00 : f32
    %33 = vector.broadcast %cst_6 : f32 to vector<32x128xf32>
    %34 = arith.addf %33, %32 : vector<32x128xf32>
    %35 = math.log %34 : vector<32x128xf32>
    %cst_7 = arith.constant 0.000000e+00 : f32
    %36 = vector.broadcast %cst_7 : f32 to vector<32x128xf32>
    %37 = arith.minimumf %15, %36 : vector<32x128xf32>
    %38 = arith.subf %37, %35 : vector<32x128xf32>
    %cst_8 = arith.constant -87.3365478 : f32
    %39 = vector.broadcast %cst_8 : f32 to vector<32x128xf32>
    %40 = arith.maximumf %38, %39 : vector<32x128xf32>
    %cst_9 = arith.constant 0.000000e+00 : f32
    %41 = vector.broadcast %cst_9 : f32 to vector<32x128xf32>
    %42 = arith.maximumf %15, %41 : vector<32x128xf32>
    %cst_10 = arith.constant 0.000000e+00 : f32
    %43 = vector.broadcast %cst_10 : f32 to vector<32x128xf32>
    %44 = arith.subf %43, %42 : vector<32x128xf32>
    %45 = arith.subf %44, %35 : vector<32x128xf32>
    %cst_11 = arith.constant -87.3365478 : f32
    %46 = vector.broadcast %cst_11 : f32 to vector<32x128xf32>
    %47 = arith.maximumf %45, %46 : vector<32x128xf32>
    %cst_12 = arith.constant 1.000000e+00 : f32
    %48 = vector.broadcast %cst_12 : f32 to vector<32x128xf32>
    %49 = arith.addf %48, %32 : vector<32x128xf32>
    %cst_13 = arith.constant 1.000000e+00 : f32
    %50 = vector.broadcast %cst_13 : f32 to vector<32x128xf32>
    %51 = arith.divf %50, %49 : vector<32x128xf32>
    %cst_14 = arith.constant 0.000000e+00 : f32
    %52 = vector.broadcast %cst_14 : f32 to vector<32x128xf32>
    %53 = arith.cmpf oge, %15, %52 : vector<32x128xf32>
    %cst_15 = arith.constant 1.000000e+00 : f32
    %54 = vector.broadcast %cst_15 : f32 to vector<32x128xf32>
    %55 = arith.select %53, %54, %32 : vector<32x128xi1>, vector<32x128xf32>
    %56 = arith.mulf %55, %51 : vector<32x128xf32>
    %cst_16 = arith.constant 1.000000e+00 : f32
    %57 = vector.broadcast %cst_16 : f32 to vector<32x128xf32>
    %58 = arith.select %53, %32, %57 : vector<32x128xi1>, vector<32x128xf32>
    %59 = arith.mulf %58, %51 : vector<32x128xf32>
    %60 = arith.mulf %59, %59 : vector<32x128xf32>
    %61 = arith.mulf %60, %40 : vector<32x128xf32>
    %62 = arith.mulf %56, %56 : vector<32x128xf32>
    %63 = arith.mulf %62, %47 : vector<32x128xf32>
    %cst_17 = arith.constant -7.500000e-01 : f32
    %64 = vector.broadcast %cst_17 : f32 to vector<32x128xf32>
    %65 = arith.mulf %64, %61 : vector<32x128xf32>
    %cst_18 = arith.constant -2.500000e-01 : f32
    %66 = vector.broadcast %cst_18 : f32 to vector<32x128xf32>
    %67 = arith.mulf %66, %63 : vector<32x128xf32>
    %68 = arith.select %28, %65, %67 : vector<32x128xi1>, vector<32x128xf32>
    %cst_19 = arith.constant 0.000000e+00 : f32
    %69 = vector.broadcast %cst_19 : f32 to vector<32x128xf32>
    %70 = arith.select %26, %68, %69 : vector<32x128xi1>, vector<32x128xf32>
    %71 = arith.andi %23, %28 : vector<32x128xi1>
    %cst_20 = arith.constant 1.000000e+00 : f32
    %cst_21 = arith.constant 0.000000e+00 : f32
    %72 = vector.broadcast %cst_20 : f32 to vector<32x128xf32>
    %73 = vector.broadcast %cst_21 : f32 to vector<32x128xf32>
    %74 = arith.select %71, %72, %73 : vector<32x128xi1>, vector<32x128xf32>
    %75 = vector.shape_cast %70 : vector<32x128xf32> to vector<4x8x128xf32>
    %cst_22 = arith.constant dense<0.000000e+00> : vector<8x128xf32>
    %76 = vector.multi_reduction <add>, %75, %cst_22 [0] : vector<4x8x128xf32> to vector<8x128xf32>
    %77 = arith.addf %11, %76 : vector<8x128xf32>
    %78 = vector.shape_cast %74 : vector<32x128xf32> to vector<4x8x128xf32>
    %cst_23 = arith.constant dense<0.000000e+00> : vector<8x128xf32>
    %79 = vector.multi_reduction <add>, %78, %cst_23 [0] : vector<4x8x128xf32> to vector<8x128xf32>
    %80 = arith.addf %11, %79 : vector<8x128xf32>
    %c1_i32_24 = arith.constant 1 : i32
    %c0_25 = arith.constant 0 : index
    %c0_26 = arith.constant 0 : index
    %81 = vector.load %arg4[%c0_25, %c0_26] : memref<8x128xf32, #tpu.memory_space<vmem>>, vector<8x128xf32>
    %82 = arith.addf %81, %77 : vector<8x128xf32>
    %c0_27 = arith.constant 0 : index
    %c0_28 = arith.constant 0 : index
    %83 = vector.load %arg4[%c0_27, %c0_28] : memref<8x128xf32, #tpu.memory_space<vmem>>, vector<8x128xf32>
    tpu.vector_store %arg4[%c0_27, %c0_28], %82 {strides = array<i32>} : memref<8x128xf32, #tpu.memory_space<vmem>>, vector<8x128xf32>,
    %c0_29 = arith.constant 0 : index
    %c0_30 = arith.constant 0 : index
    %84 = vector.load %arg5[%c0_29, %c0_30] : memref<8x128xf32, #tpu.memory_space<vmem>>, vector<8x128xf32>
    %85 = arith.addf %84, %80 : vector<8x128xf32>
    %c0_31 = arith.constant 0 : index
    %c0_32 = arith.constant 0 : index
    %86 = vector.load %arg5[%c0_31, %c0_32] : memref<8x128xf32, #tpu.memory_space<vmem>>, vector<8x128xf32>
    tpu.vector_store %arg5[%c0_31, %c0_32], %85 {strides = array<i32>} : memref<8x128xf32, #tpu.memory_space<vmem>>, vector<8x128xf32>,
    return
  }
  func.func @transform_0(%arg0: i32, %arg1: i32) -> (i32, i32) {
    %c1_i32 = arith.constant 1 : i32
    %0 = arith.muli %arg0, %c1_i32 : i32
    %1 = arith.addi %0, %arg1 : i32
    %c0_i32 = arith.constant 0 : i32
    %2 = arith.minsi %1, %c0_i32 : i32
    %c0_i32_0 = arith.constant 0 : i32
    %c0_i32_1 = arith.constant 0 : i32
    return %2, %c0_i32_0 : i32, i32
  }
  func.func @transform_1(%arg0: i32, %arg1: i32) -> (i32, i32) {
    %c1_i32 = arith.constant 1 : i32
    %0 = arith.muli %arg0, %c1_i32 : i32
    %1 = arith.addi %0, %arg1 : i32
    %c0_i32 = arith.constant 0 : i32
    %2 = arith.minsi %1, %c0_i32 : i32
    %c0_i32_0 = arith.constant 0 : i32
    %c0_i32_1 = arith.constant 0 : i32
    return %2, %c0_i32_0 : i32, i32
  }
  func.func @transform_2(%arg0: i32, %arg1: i32) -> (i32, i32) {
    %c0_i32 = arith.constant 0 : i32
    %c0_i32_0 = arith.constant 0 : i32
    return %arg0, %c0_i32 : i32, i32
  }
  func.func @transform_3(%arg0: i32, %arg1: i32) -> (i32, i32) {
    %c0_i32 = arith.constant 0 : i32
    %c0_i32_0 = arith.constant 0 : i32
    return %arg0, %c0_i32 : i32, i32
  }
}

</mosaic_0001>

<llo_original>
// kernel: tpu_custom_call.1
$region0: #{tpu_custom_call.1}
  #allocation0 [shape = 'u32[]', space=smem, size = 0x4, offset = 0x4, fixed_abs, tag = 'smem constant byte address 0x4 - core index']
  #allocation1 [shape = 'u32[72,128]{1,0:T(1,128)}', space=vmem, size = 0x9000, scoped, tag = 'internal scratch']
  %s0 = inlined_call_operand.hbm [shape: f32[16,128], index: 0, kind: input, shape index: {}]
  %s1 = inlined_call_operand.hbm [shape: s8[32,128], index: 1, kind: input, shape index: {}]
  %s2 = inlined_call_operand.hbm [shape: f32[8,128], index: 2, kind: output, shape index: {0}]
  %s3 = inlined_call_operand.hbm [shape: f32[8,128], index: 3, kind: output, shape index: {1}]
  %4 = xla_tuple %s2, %s3
  %s5 = sld [smem:[#allocation0]]
  $region38: #{tpu_custom_call.1} parent=0
    _
  %s7 = ssub.s32 1, %s5
  %s8 = scalar_select 0, %s7, %s5
  $region1: #{tpu_custom_call.1} parent=0
    #allocation2 [shape = 'u8[16384]{0}', space=vmem, size = 0x4000, scoped, tag = 'input window, operand 0, single buffered']
    #allocation3 [shape = 's32[1]{0}', space=sflag, size = 0x4, scoped, tag = 'scoped memory for tpu_custom_call.1']
    #allocation4 [shape = 's32[1]{0}', space=sflag, size = 0x4, scoped, tag = 'scoped memory for tpu_custom_call.1']
    #allocation5 [shape = 'u8[4096]{0}', space=vmem, size = 0x1000, scoped, tag = 'input window, operand 1, single buffered']
    #allocation6 [shape = 's32[1]{0}', space=sflag, size = 0x4, scoped, tag = 'scoped memory for tpu_custom_call.1']
    #allocation7 [shape = 'u8[4096]{0}', space=vmem, size = 0x1000, scoped, tag = 'output window, operand 0, single buffered']
    #allocation8 [shape = 'u8[4096]{0}', space=vmem, size = 0x1000, scoped, tag = 'output window, operand 1, single buffered']
    #allocation9 [shape = 's32[1]{0}', space=sflag, size = 0x4, scoped, tag = 'scoped memory for tpu_custom_call.1']
    %9 = vsyncpa [#allocation3], 0
    %10 = vsyncpa [#allocation6], 0
    %11 = vsyncpa [#allocation4], 0
    %12 = vsyncpa [#allocation9], 0
    // Predicated region
    $region2: #{tpu_custom_call.1} parent=1 // pred_check
      _
    $region3: #{tpu_custom_call.1} parent=1 // pred_check_branch
      %14 = sbr.rel (0) target = $region5
    $region4: #{tpu_custom_call.1} parent=1 // pred_region
      %s15 = sadd.s32 0, 0
      %p16 = scmp.lt.s32.totalorder %s15, 0
      %s17 = scalar_select %p16, %s15, 0
      %s18 = smul.u32 4, %s17
      %s19 = ssub.s32 2, %s18
      %s20 = smul.u32 8, %s19
      %s21 = ssub.s32 32, %s20
      %s22 = sshll.u32 %s21, 4
      %23 = vsyncadd [#allocation3], %s22
      %p24 = scmp.ne.s32.totalorder 0, %s20
      %s25 = smul.addr %s18, 8
      %s26 = scalar_lea.hbm %s0, %s25
      %s27 = smul.u32 8, %s19
      %s28 = sshll.u32 %s26, 4
      %s29 = int_to_ptr.hbm [resolvable:$true] %s28
      %s30 = sshll.u32 [#allocation2], 4
      %s31 = int_to_ptr.vmem [resolvable:$true] %s30
      %s32 = sshll.u32 %s27, 4
      %36 = dma.hbm_to_vmem [thread:$0]  (%p24), %s29, %s32, %s31, [#allocation3], 128, 128, 8
    $region5: #{tpu_custom_call.1} parent=1 // pred_fallthru
      _
    // Predicated region
    $region6: #{tpu_custom_call.1} parent=1 // pred_check
      _
    $region7: #{tpu_custom_call.1} parent=1 // pred_check_branch
      %38 = sbr.rel (0) target = $region9
    $region8: #{tpu_custom_call.1} parent=1 // pred_region
      %s39 = sadd.s32 0, 0
      %p40 = scmp.lt.s32.totalorder %s39, 0
      %s41 = scalar_select %p40, %s39, 0
      %43 = vsyncadd [#allocation6], 0
      %s44 = smul.addr %s41, 8
      %s45 = scalar_lea.hbm %s1, %s44
      %s47 = sshll.u32 %s45, 4
      %s48 = int_to_ptr.hbm [resolvable:$true] %s47
      %s49 = sshll.u32 [#allocation5], 4
      %s50 = int_to_ptr.vmem [resolvable:$true] %s49
      %52 = dma.hbm_to_vmem [thread:$0]  %s48, 128, %s50, [#allocation6]
    $region9: #{tpu_custom_call.1} parent=1 // pred_fallthru
      _
    // Predicated region
    $region10: #{tpu_custom_call.1} parent=1 // pred_check
      _
    $region11: #{tpu_custom_call.1} parent=1 // pred_check_branch
      %54 = sbr.rel (0) target = $region13
    $region12: #{tpu_custom_call.1} parent=1 // pred_region
      %56 = dma.done [#allocation3], 512
    $region13: #{tpu_custom_call.1} parent=1 // pred_fallthru
      _
    // Predicated region
    $region14: #{tpu_custom_call.1} parent=1 // pred_check
      _
    $region15: #{tpu_custom_call.1} parent=1 // pred_check_branch
      %58 = sbr.rel (0) target = $region17
    $region16: #{tpu_custom_call.1} parent=1 // pred_region
      %60 = dma.done [#allocation6], 128
    $region17: #{tpu_custom_call.1} parent=1 // pred_fallthru
      _
    %s61 = sadd.s32 0, 0
    %p62 = scmp.lt.s32.totalorder %s61, 0
    %s63 = scalar_select %p62, %s61, 0
    %s64 = smul.u32 4, %s63
    %s65 = ssub.s32 2, %s64
    %s66 = smul.u32 8, %s65
    %s67 = sadd.s32 0, 0
    %p68 = scmp.lt.s32.totalorder %s67, 0
    %s69 = scalar_select %p68, %s67, 0
    %p70 = scmp.eq.s32.totalorder 0, 0
    // Predicated region
    $region18: #{tpu_custom_call.1} parent=1 // pred_check
      %p71 = pneg %p70
    $region19: #{tpu_custom_call.1} parent=1 // pred_check_branch
      %73 = sbr.rel (%p71) target = $region21
    $region20: #{tpu_custom_call.1} parent=1 // pred_region
      %74 = vst [vmem:[#allocation7] sm:$0xff] 0.0
      %75 = vst [vmem:[#allocation8] sm:$0xff] 0.0
    $region21: #{tpu_custom_call.1} parent=1 // pred_fallthru
      _
    %s76 = sadd.s32 0, 0
    %s77 = smul.u32 %s76, 4096
    %v78 = vlaneseq
    %v79 = vshrl.u32 %v78, 7
    %v80 = vadd.s32 %v79, 8
    %v81 = vadd.s32 %v79, 16
    %v82 = vadd.s32 %v79, 24
    %v83 = vlaneseq
    %v84 = vand.u32 %v83, 127
    %v85 = vmul.u32 %v79, 128
    %v86 = vmul.u32 %v80, 128
    %v87 = vmul.u32 %v81, 128
    %v88 = vmul.u32 %v82, 128
    %v89 = vadd.s32 %v85, %v84
    %v90 = vadd.s32 %v86, %v84
    %v91 = vadd.s32 %v87, %v84
    %v92 = vadd.s32 %v88, %v84
    %v93 = vld [vmem:[#allocation2] sm:$0xff]
    %v94 = vld [vmem:[#allocation2 + $0x8] sm:$0xff]
    %v95 = vld [vmem:[#allocation2 + $0x10] sm:$0xff]
    %v96 = vld [vmem:[#allocation2 + $0x18] sm:$0xff]
    %v97 = vld [vmem:[#allocation5] sm:$0xff]
    %v98 = vunpack.c.0.s8 %v97
    %v99 = vunpack.c.1.s8 %v97
    %v100 = vunpack.c.2.s8 %v97
    %v101 = vunpack.c.3.s8 %v97
    %s102 = ssub.s32 2048, %s77
    %v103 = vstv %s102
    %vm104 = vcmp.lt.s32.totalorder %v89, %v103
    %vm105 = vcmp.lt.s32.totalorder %v90, %v103
    %vm106 = vcmp.lt.s32.totalorder %v91, %v103
    %vm107 = vcmp.lt.s32.totalorder %v92, %v103
    %vm108 = vcmp.ne.s32.totalorder %v98, 4294967295
    %vm109 = vcmp.ne.s32.totalorder %v99, 4294967295
    %vm110 = vcmp.ne.s32.totalorder %v100, 4294967295
    %vm111 = vcmp.ne.s32.totalorder %v101, 4294967295
    %vm112 = vmand %vm104, %vm108
    %vm113 = vmand %vm105, %vm109
    %vm114 = vmand %vm106, %vm110
    %vm115 = vmand %vm107, %vm111
    %vm116 = vcmp.eq.s32.totalorder %v98, 1
    %vm117 = vcmp.eq.s32.totalorder %v99, 1
    %vm118 = vcmp.eq.s32.totalorder %v100, 1
    %vm119 = vcmp.eq.s32.totalorder %v101, 1
    %v120 = vand.u32 2147483647, %v93
    %v121 = vand.u32 2147483647, %v94
    %v122 = vand.u32 2147483647, %v95
    %v123 = vand.u32 2147483647, %v96
    %v124 = vsub.f32 0.0, %v120
    %v125 = vsub.f32 0.0, %v121
    %v126 = vsub.f32 0.0, %v122
    %v127 = vsub.f32 0.0, %v123
    %v128 = vmul.f32 %v124, 1.442695
    %v129 = vpow.pop %v128
    %v130 = vmul.f32 %v125, 1.442695
    %v131 = vpow.pop %v130
    %v132 = vmul.f32 %v126, 1.442695
    %v133 = vpow.pop %v132
    %v134 = vmul.f32 %v127, 1.442695
    %v135 = vpow.pop %v134
    %v136 = vadd.f32 %v129, 1.0
    %v137 = vadd.f32 %v131, 1.0
    %v138 = vadd.f32 %v133, 1.0
    %v139 = vadd.f32 %v135, 1.0
    %v140 = vlog2.pop %v136
    %v141 = vmul.f32 %v140, 0.6931472
    %v142 = vlog2.pop %v137
    %v143 = vmul.f32 %v142, 0.6931472
    %v144 = vlog2.pop %v138
    %v145 = vmul.f32 %v144, 0.6931472
    %v146 = vlog2.pop %v139
    %v147 = vmul.f32 %v146, 0.6931472
    %v148 = vmin.f32 %v93, 0.0
    %v149 = vmin.f32 %v94, 0.0
    %v150 = vmin.f32 %v95, 0.0
    %v151 = vmin.f32 %v96, 0.0
    %v152 = vsub.f32 %v148, %v141
    %v153 = vsub.f32 %v149, %v143
    %v154 = vsub.f32 %v150, %v145
    %v155 = vsub.f32 %v151, %v147
    %v156 = vmax.f32 %v152, -87.33655
    %v157 = vmax.f32 %v153, -87.33655
    %v158 = vmax.f32 %v154, -87.33655
    %v159 = vmax.f32 %v155, -87.33655
    %v160 = vmax.f32 %v93, 0.0
    %v161 = vmax.f32 %v94, 0.0
    %v162 = vmax.f32 %v95, 0.0
    %v163 = vmax.f32 %v96, 0.0
    %v164 = vsub.f32 0.0, %v160
    %v165 = vsub.f32 0.0, %v161
    %v166 = vsub.f32 0.0, %v162
    %v167 = vsub.f32 0.0, %v163
    %v168 = vsub.f32 %v164, %v141
    %v169 = vsub.f32 %v165, %v143
    %v170 = vsub.f32 %v166, %v145
    %v171 = vsub.f32 %v167, %v147
    %v172 = vmax.f32 %v168, -87.33655
    %v173 = vmax.f32 %v169, -87.33655
    %v174 = vmax.f32 %v170, -87.33655
    %v175 = vmax.f32 %v171, -87.33655
    %v176 = vrcp.pop %v136
    %v177 = vmul.f32 %v136, %v176
    %v178 = vsub.f32 1.0, %v177
    %v179 = vmul.f32 %v176, %v178
    %v180 = vadd.f32 %v176, %v179
    %vm181 = vweird.f32 %v136
    %vm182 = vweird.f32 %v176
    %vm183 = vmor %vm181, %vm182
    %v184 = vsel %vm183, %v176, %v180
    %v185 = vand.u32 2147483647, %v136
    %vm186 = vcmp.eq.f32.partialorder %v185, 8.507059e+37
    %v187 = vand.u32 %v136, 2147483648
    %v188 = vor.u32 1.1754944e-38, %v187
    %v189 = vsel %vm186, %v188, %v184
    %v190 = vmul.f32 1.0, %v189
    %v191 = vrcp.pop %v137
    %v192 = vmul.f32 %v137, %v191
    %v193 = vsub.f32 1.0, %v192
    %v194 = vmul.f32 %v191, %v193
    %v195 = vadd.f32 %v191, %v194
    %vm196 = vweird.f32 %v137
    %vm197 = vweird.f32 %v191
    %vm198 = vmor %vm196, %vm197
    %v199 = vsel %vm198, %v191, %v195
    %v200 = vand.u32 2147483647, %v137
    %vm201 = vcmp.eq.f32.partialorder %v200, 8.507059e+37
    %v202 = vand.u32 %v137, 2147483648
    %v203 = vor.u32 1.1754944e-38, %v202
    %v204 = vsel %vm201, %v203, %v199
    %v205 = vmul.f32 1.0, %v204
    %v206 = vrcp.pop %v138
    %v207 = vmul.f32 %v138, %v206
    %v208 = vsub.f32 1.0, %v207
    %v209 = vmul.f32 %v206, %v208
    %v210 = vadd.f32 %v206, %v209
    %vm211 = vweird.f32 %v138
    %vm212 = vweird.f32 %v206
    %vm213 = vmor %vm211, %vm212
    %v214 = vsel %vm213, %v206, %v210
    %v215 = vand.u32 2147483647, %v138
    %vm216 = vcmp.eq.f32.partialorder %v215, 8.507059e+37
    %v217 = vand.u32 %v138, 2147483648
    %v218 = vor.u32 1.1754944e-38, %v217
    %v219 = vsel %vm216, %v218, %v214
    %v220 = vmul.f32 1.0, %v219
    %v221 = vrcp.pop %v139
    %v222 = vmul.f32 %v139, %v221
    %v223 = vsub.f32 1.0, %v222
    %v224 = vmul.f32 %v221, %v223
    %v225 = vadd.f32 %v221, %v224
    %vm226 = vweird.f32 %v139
    %vm227 = vweird.f32 %v221
    %vm228 = vmor %vm226, %vm227
    %v229 = vsel %vm228, %v221, %v225
    %v230 = vand.u32 2147483647, %v139
    %vm231 = vcmp.eq.f32.partialorder %v230, 8.507059e+37
    %v232 = vand.u32 %v139, 2147483648
    %v233 = vor.u32 1.1754944e-38, %v232
    %v234 = vsel %vm231, %v233, %v229
    %v235 = vmul.f32 1.0, %v234
    %vm236 = vcmp.ge.f32.partialorder %v93, 0.0
    %vm237 = vcmp.ge.f32.partialorder %v94, 0.0
    %vm238 = vcmp.ge.f32.partialorder %v95, 0.0
    %vm239 = vcmp.ge.f32.partialorder %v96, 0.0
    %v240 = vsel %vm236, 1.0, %v129
    %v241 = vsel %vm237, 1.0, %v131
    %v242 = vsel %vm238, 1.0, %v133
    %v243 = vsel %vm239, 1.0, %v135
    %v244 = vmul.f32 %v240, %v190
    %v245 = vmul.f32 %v241, %v205
    %v246 = vmul.f32 %v242, %v220
    %v247 = vmul.f32 %v243, %v235
    %v248 = vsel %vm236, %v129, 1.0
    %v249 = vsel %vm237, %v131, 1.0
    %v250 = vsel %vm238, %v133, 1.0
    %v251 = vsel %vm239, %v135, 1.0
    %v252 = vmul.f32 %v248, %v190
    %v253 = vmul.f32 %v249, %v205
    %v254 = vmul.f32 %v250, %v220
    %v255 = vmul.f32 %v251, %v235
    %v256 = vmul.f32 %v252, %v252
    %v257 = vmul.f32 %v253, %v253
    %v258 = vmul.f32 %v254, %v254
    %v259 = vmul.f32 %v255, %v255
    %v260 = vmul.f32 %v256, %v156
    %v261 = vmul.f32 %v257, %v157
    %v262 = vmul.f32 %v258, %v158
    %v263 = vmul.f32 %v259, %v159
    %v264 = vmul.f32 %v244, %v244
    %v265 = vmul.f32 %v245, %v245
    %v266 = vmul.f32 %v246, %v246
    %v267 = vmul.f32 %v247, %v247
    %v268 = vmul.f32 %v264, %v172
    %v269 = vmul.f32 %v265, %v173
    %v270 = vmul.f32 %v266, %v174
    %v271 = vmul.f32 %v267, %v175
    %v272 = vmul.f32 %v260, -0.75
    %v273 = vmul.f32 %v261, -0.75
    %v274 = vmul.f32 %v262, -0.75
    %v275 = vmul.f32 %v263, -0.75
    %v276 = vmul.f32 %v268, -0.25
    %v277 = vmul.f32 %v269, -0.25
    %v278 = vmul.f32 %v270, -0.25
    %v279 = vmul.f32 %v271, -0.25
    %v280 = vsel %vm116, %v272, %v276
    %v281 = vsel %vm117, %v273, %v277
    %v282 = vsel %vm118, %v274, %v278
    %v283 = vsel %vm119, %v275, %v279
    %v284 = vsel %vm112, %v280, 0.0
    %v285 = vsel %vm113, %v281, 0.0
    %v286 = vsel %vm114, %v282, 0.0
    %v287 = vsel %vm115, %v283, 0.0
    %vm288 = vmand %vm104, %vm116
    %vm289 = vmand %vm105, %vm117
    %vm290 = vmand %vm106, %vm118
    %vm291 = vmand %vm107, %vm119
    %v292 = vsel %vm288, 1.0, 0.0
    %v293 = vsel %vm289, 1.0, 0.0
    %v294 = vsel %vm290, 1.0, 0.0
    %v295 = vsel %vm291, 1.0, 0.0
    %v296 = vadd.f32 %v284, %v285
    %v297 = vadd.f32 %v296, %v286
    %v298 = vadd.f32 %v297, %v287
    %v299 = vadd.f32 %v298, 0.0
    %v300 = vadd.f32 %v292, %v293
    %v301 = vadd.f32 %v300, %v294
    %v302 = vadd.f32 %v301, %v295
    %v303 = vadd.f32 %v302, 0.0
    %v304 = vld [vmem:[#allocation7] sm:$0xff]
    %v305 = vadd.f32 %v304, %v299
    %306 = vst [vmem:[#allocation7] sm:$0xff] %v305
    %v307 = vld [vmem:[#allocation8] sm:$0xff]
    %v308 = vadd.f32 %v307, %v303
    %309 = vst [vmem:[#allocation8] sm:$0xff] %v308
    // Predicated region
    $region22: #{tpu_custom_call.1} parent=1 // pred_check
      _
    $region23: #{tpu_custom_call.1} parent=1 // pred_check_branch
      %311 = sbr.rel (0) target = $region25
    $region24: #{tpu_custom_call.1} parent=1 // pred_region
      %313 = vsyncadd [#allocation4], 0
      %s315 = sshll.u32 [#allocation7], 4
      %s316 = int_to_ptr.vmem [resolvable:$true] %s315
      %s317 = sshll.u32 %s2, 4
      %s318 = int_to_ptr.hbm [resolvable:$true] %s317
      %320 = dma.vmem_to_hbm [thread:$0]  %s316, 128, %s318, [#allocation4]
    $region25: #{tpu_custom_call.1} parent=1 // pred_fallthru
      _
    // Predicated region
    $region26: #{tpu_custom_call.1} parent=1 // pred_check
      _
    $region27: #{tpu_custom_call.1} parent=1 // pred_check_branch
      %322 = sbr.rel (0) target = $region29
    $region28: #{tpu_custom_call.1} parent=1 // pred_region
      %324 = vsyncadd [#allocation9], 0
      %s326 = sshll.u32 [#allocation8], 4
      %s327 = int_to_ptr.vmem [resolvable:$true] %s326
      %s328 = sshll.u32 %s3, 4
      %s329 = int_to_ptr.hbm [resolvable:$true] %s328
      %331 = dma.vmem_to_hbm [thread:$0]  %s327, 128, %s329, [#allocation9]
    $region29: #{tpu_custom_call.1} parent=1 // pred_fallthru
      _
    // Predicated region
    $region30: #{tpu_custom_call.1} parent=1 // pred_check
      _
    $region31: #{tpu_custom_call.1} parent=1 // pred_check_branch
      %333 = sbr.rel (0) target = $region33
    $region32: #{tpu_custom_call.1} parent=1 // pred_region
      %335 = dma.done [#allocation4], 128
    $region33: #{tpu_custom_call.1} parent=1 // pred_fallthru
      _
    // Predicated region
    $region34: #{tpu_custom_call.1} parent=1 // pred_check
      _
    $region35: #{tpu_custom_call.1} parent=1 // pred_check_branch
      %337 = sbr.rel (0) target = $region37
    $region36: #{tpu_custom_call.1} parent=1 // pred_region
      %339 = dma.done [#allocation9], 128
    $region37: #{tpu_custom_call.1} parent=1 // pred_fallthru
      _
    %340 = vsyncpa [#allocation3], 1
    %341 = vsyncpa [#allocation6], 1
    %342 = vsyncpa [#allocation4], 1
    %343 = vsyncpa [#allocation9], 1

</llo_original>
